<compile_context>
chip_gen: v5e
topology: v5e:2x2
jax: 0.10.0
libtpu: 0.0.40
codegen_flags: <defaults>
</compile_context>

<pallas_src>
import jax
import jax.numpy as jnp
from jax.experimental import pallas as pl
from jax.experimental.pallas import tpu as pltpu

_LANES = 128               # vreg lane width: last dim always exactly 128
_SINGLE_BLOCK_ROWS = 4096  # <= this many rows: one full-array block, no grid
_JNP_FASTPATH_BYTES = 1 << 20  # below ~1 MiB plain XLA fusion beats a kernel call


def _fused_add_relu_square_kernel(t1_ref, x_ref, o_ref):
    t3 = t1_ref[...] + x_ref[...]
    t4 = jnp.maximum(t3, 0.0)      # ReLU via max-with-immediate splat
    o_ref[...] = t4 * t4


def _pick_tile_rows(rows):
    # Largest tile (best HBM bandwidth) that still leaves >= 4 grid steps so
    # both v7x TensorCores have work; 4096*128*4B = 2 MiB per block.
    for t in (4096, 2048, 1024, 512):
        if pl.cdiv(rows, t) >= 4:
            return t
    return 512


def fused_add_relu_square(t1, x1, *, force_pallas=False):
    assert t1.shape == x1.shape and t1.dtype == x1.dtype
    orig_shape = t1.shape
    dtype = t1.dtype
    itemsize = jnp.dtype(dtype).itemsize

    total = 1
    for d in orig_shape:
        total *= d

    # Tiny inputs: a single fused XLA elementwise pass is faster than any
    # pallas_call (fixed ~us overhead).  Disabled when force_pallas=True.
    if not force_pallas and total * itemsize < _JNP_FASTPATH_BYTES:
        return jnp.square(jnp.maximum(t1 + x1, 0.0))

    # Lane-dense view: flatten to (rows, 128).  Lane padding only when the
    # element count is not a multiple of 128 (relu(0+0)**2 == 0, pad sliced
    # off afterwards); for this module 2560 % 128 == 0 so no pad / no slice.
    t1_flat = t1.reshape(-1)
    x1_flat = x1.reshape(-1)
    padded_total = pl.cdiv(total, _LANES) * _LANES
    if padded_total != total:
        pad = padded_total - total
        t1_flat = jnp.pad(t1_flat, (0, pad))
        x1_flat = jnp.pad(x1_flat, (0, pad))
    rows = padded_total // _LANES
    t1_2d = t1_flat.reshape(rows, _LANES)
    x1_2d = x1_flat.reshape(rows, _LANES)

    if rows <= _SINGLE_BLOCK_ROWS:
        # Single full-array block (exempt from the (8,128) divisibility rule).
        spec = pl.BlockSpec((rows, _LANES), lambda: (0, 0),
                            memory_space=pltpu.MemorySpace.VMEM)
        out_2d = pl.pallas_call(
            _fused_add_relu_square_kernel,
            out_shape=jax.ShapeDtypeStruct((rows, _LANES), dtype),
            in_specs=[spec, spec],
            out_specs=spec,
        )(t1_2d, x1_2d)
    else:
        # Gridded path: lane-dense row tiles, auto double-buffered DMA.
        # No row padding — Pallas masks the ragged last block; OOB reads only
        # feed pad-region outputs whose writes are dropped.
        tile_rows = _pick_tile_rows(rows)
        spec = pl.BlockSpec((tile_rows, _LANES), lambda i: (i, 0),
                            memory_space=pltpu.MemorySpace.VMEM)
        out_2d = pl.pallas_call(
            _fused_add_relu_square_kernel,
            out_shape=jax.ShapeDtypeStruct((rows, _LANES), dtype),
            grid=(pl.cdiv(rows, tile_rows),),
            in_specs=[spec, spec],
            out_specs=spec,
            compiler_params=pltpu.CompilerParams(
                dimension_semantics=("parallel",)),
            cost_estimate=pl.CostEstimate(
                flops=3 * total,
                transcendentals=0,
                bytes_accessed=3 * total * itemsize),
        )(t1_2d, x1_2d)

    if padded_total != total:
        return out_2d.reshape(-1)[:total].reshape(orig_shape)
    return out_2d.reshape(orig_shape)


if __name__ == "__main__":
    key = jax.random.PRNGKey(0)
    k1, k2, k3, k4 = jax.random.split(key, 4)

    # Module parameter t1 and input x1 (shapes from the PyTorch spec).
    shape = (1, 10, 16, 16)
    t1 = jax.random.uniform(k1, shape, dtype=jnp.float32)   # torch.rand equivalent
    x1 = jax.random.uniform(k2, shape, dtype=jnp.float32)

    out = fused_add_relu_square(t1, x1, force_pallas=True)  # exercise the kernel
    out = jax.block_until_ready(out)
    ref = jnp.square(jnp.maximum(t1 + x1, 0.0))
    assert out.shape == shape
    assert jnp.allclose(out, ref, atol=1e-6), "small-path mismatch vs reference"

    # Also exercise the gridded (large-input) path once.
    big_shape = (8, 10, 128, 128)   # 1,310,720 elems -> 10240 rows, multi-step grid
    t1_big = jax.random.uniform(k3, big_shape, dtype=jnp.float32)
    x1_big = jax.random.uniform(k4, big_shape, dtype=jnp.float32)
    out_big = jax.block_until_ready(fused_add_relu_square(t1_big, x1_big))
    ref_big = jnp.square(jnp.maximum(t1_big + x1_big, 0.0))
    assert jnp.allclose(out_big, ref_big, atol=1e-6), "large-path mismatch vs reference"

    print("KERNEL_OK")
</pallas_src>

<mosaic_0001>
module attributes {stable_mosaic.version = 11 : i64} {
  func.func @_fused_add_relu_square_kernel(%arg0: memref<20x128xf32, #tpu.memory_space<vmem>>, %arg1: memref<20x128xf32, #tpu.memory_space<vmem>>, %arg2: memref<20x128xf32, #tpu.memory_space<vmem>>) attributes {dimension_semantics = [], scalar_prefetch = 0 : i64, scratch_operands = 0 : i64, tpu.core_type = #tpu.core_type<tc>} {
    %c0 = arith.constant 0 : index
    %c0_0 = arith.constant 0 : index
    %0 = vector.load %arg0[%c0, %c0_0] : memref<20x128xf32, #tpu.memory_space<vmem>>, vector<20x128xf32>
    %c0_1 = arith.constant 0 : index
    %c0_2 = arith.constant 0 : index
    %1 = vector.load %arg1[%c0_1, %c0_2] : memref<20x128xf32, #tpu.memory_space<vmem>>, vector<20x128xf32>
    %2 = arith.addf %0, %1 : vector<20x128xf32>
    %cst = arith.constant 0.000000e+00 : f32
    %3 = vector.broadcast %cst : f32 to vector<20x128xf32>
    %4 = arith.maximumf %2, %3 : vector<20x128xf32>
    %5 = arith.mulf %4, %4 : vector<20x128xf32>
    %c0_3 = arith.constant 0 : index
    %c0_4 = arith.constant 0 : index
    %6 = vector.load %arg2[%c0_3, %c0_4] : memref<20x128xf32, #tpu.memory_space<vmem>>, vector<20x128xf32>
    tpu.vector_store %arg2[%c0_3, %c0_4], %5 {strides = array<i32>} : memref<20x128xf32, #tpu.memory_space<vmem>>, vector<20x128xf32>,
    return
  }
}

</mosaic_0001>

<llo_original>
// kernel: tpu_custom_call.1
$region0: #{tpu_custom_call.1}
  #allocation0 [shape = 'u32[]', space=smem, size = 0x4, offset = 0x4, fixed_abs, tag = 'smem constant byte address 0x4 - core index']
  #allocation1 [shape = 'u32[72,128]{1,0:T(1,128)}', space=vmem, size = 0x9000, scoped, tag = 'internal scratch']
  %s0 = inlined_call_operand.hbm [shape: f32[20,128], index: 0, kind: input, shape index: {}]
  %s1 = inlined_call_operand.hbm [shape: f32[20,128], index: 1, kind: input, shape index: {}]
  %s2 = inlined_call_operand.hbm [shape: f32[20,128], index: 2, kind: output, shape index: {}]
  %s3 = sld [smem:[#allocation0]]
  $region26: #{tpu_custom_call.1} parent=0
    _
  %s5 = ssub.s32 1, %s3
  %s6 = scalar_select 0, %s5, %s3
  $region1: #{tpu_custom_call.1} parent=0
    #allocation2 [shape = 'u8[12288]{0}', space=vmem, size = 0x3000, scoped, tag = 'input window, operand 0, single buffered']
    #allocation3 [shape = 's32[1]{0}', space=sflag, size = 0x4, scoped, tag = 'scoped memory for tpu_custom_call.1']
    #allocation4 [shape = 's32[1]{0}', space=sflag, size = 0x4, scoped, tag = 'scoped memory for tpu_custom_call.1']
    #allocation5 [shape = 'u8[12288]{0}', space=vmem, size = 0x3000, scoped, tag = 'input window, operand 1, single buffered']
    #allocation6 [shape = 's32[1]{0}', space=sflag, size = 0x4, scoped, tag = 'scoped memory for tpu_custom_call.1']
    #allocation7 [shape = 'u8[12288]{0}', space=vmem, size = 0x3000, scoped, tag = 'output window, operand 0, single buffered']
    %7 = vsyncpa [#allocation3], 0
    %8 = vsyncpa [#allocation6], 0
    %9 = vsyncpa [#allocation4], 0
    // Predicated region
    $region2: #{tpu_custom_call.1} parent=1 // pred_check
      _
    $region3: #{tpu_custom_call.1} parent=1 // pred_check_branch
      %11 = sbr.rel (0) target = $region5
    $region4: #{tpu_custom_call.1} parent=1 // pred_region
      %13 = vsyncadd [#allocation3], 0
      %s14 = sshll.u32 %s0, 4
      %s15 = int_to_ptr.hbm [resolvable:$true] %s14
      %s16 = sshll.u32 [#allocation2], 4
      %s17 = int_to_ptr.vmem [resolvable:$true] %s16
      %22 = dma.hbm_to_vmem [thread:$0]  %s15, 384, %s17, [#allocation3], 128, 128, 8
    $region5: #{tpu_custom_call.1} parent=1 // pred_fallthru
      _
    // Predicated region
    $region6: #{tpu_custom_call.1} parent=1 // pred_check
      _
    $region7: #{tpu_custom_call.1} parent=1 // pred_check_branch
      %24 = sbr.rel (0) target = $region9
    $region8: #{tpu_custom_call.1} parent=1 // pred_region
      %26 = vsyncadd [#allocation6], 0
      %s27 = sshll.u32 %s1, 4
      %s28 = int_to_ptr.hbm [resolvable:$true] %s27
      %s29 = sshll.u32 [#allocation5], 4
      %s30 = int_to_ptr.vmem [resolvable:$true] %s29
      %35 = dma.hbm_to_vmem [thread:$0]  %s28, 384, %s30, [#allocation6], 128, 128, 8
    $region9: #{tpu_custom_call.1} parent=1 // pred_fallthru
      _
    // Predicated region
    $region10: #{tpu_custom_call.1} parent=1 // pred_check
      _
    $region11: #{tpu_custom_call.1} parent=1 // pred_check_branch
      %37 = sbr.rel (0) target = $region13
    $region12: #{tpu_custom_call.1} parent=1 // pred_region
      %39 = dma.done [#allocation3], 384
    $region13: #{tpu_custom_call.1} parent=1 // pred_fallthru
      _
    // Predicated region
    $region14: #{tpu_custom_call.1} parent=1 // pred_check
      _
    $region15: #{tpu_custom_call.1} parent=1 // pred_check_branch
      %41 = sbr.rel (0) target = $region17
    $region16: #{tpu_custom_call.1} parent=1 // pred_region
      %43 = dma.done [#allocation6], 384
    $region17: #{tpu_custom_call.1} parent=1 // pred_fallthru
      _
    %v44 = vld [vmem:[#allocation2] sm:$0xff]
    %v45 = vld [vmem:[#allocation2 + $0x8] sm:$0xff]
    %v46 = vld [vmem:[#allocation2 + $0x10] sm:$0xf]
    %v47 = vld [vmem:[#allocation5] sm:$0xff]
    %v48 = vld [vmem:[#allocation5 + $0x8] sm:$0xff]
    %v49 = vld [vmem:[#allocation5 + $0x10] sm:$0xf]
    %v50 = vadd.f32 %v44, %v47
    %v51 = vadd.f32 %v45, %v48
    %v52 = vadd.f32 %v46, %v49
    %v53 = vmax.f32 %v50, 0.0
    %v54 = vmax.f32 %v51, 0.0
    %v55 = vmax.f32 %v52, 0.0
    %v56 = vmul.f32 %v53, %v53
    %v57 = vmul.f32 %v54, %v54
    %v58 = vmul.f32 %v55, %v55
    %59 = vst [vmem:[#allocation7] sm:$0xff] %v56
    %60 = vst [vmem:[#allocation7 + $0x8] sm:$0xff] %v57
    %61 = vst [vmem:[#allocation7 + $0x10] sm:$0xf] %v58
    // Predicated region
    $region18: #{tpu_custom_call.1} parent=1 // pred_check
      _
    $region19: #{tpu_custom_call.1} parent=1 // pred_check_branch
      %63 = sbr.rel (0) target = $region21
    $region20: #{tpu_custom_call.1} parent=1 // pred_region
      %65 = vsyncadd [#allocation4], 0
      %s66 = sshll.u32 [#allocation7], 4
      %s67 = int_to_ptr.vmem [resolvable:$true] %s66
      %s68 = sshll.u32 %s2, 4
      %s69 = int_to_ptr.hbm [resolvable:$true] %s68
      %74 = dma.vmem_to_hbm [thread:$0]  %s67, 384, %s69, [#allocation4], 128, 128, 8
    $region21: #{tpu_custom_call.1} parent=1 // pred_fallthru
      _
    // Predicated region
    $region22: #{tpu_custom_call.1} parent=1 // pred_check
      _
    $region23: #{tpu_custom_call.1} parent=1 // pred_check_branch
      %76 = sbr.rel (0) target = $region25
    $region24: #{tpu_custom_call.1} parent=1 // pred_region
      %78 = dma.done [#allocation4], 384
    $region25: #{tpu_custom_call.1} parent=1 // pred_fallthru
      _
    %79 = vsyncpa [#allocation3], 1
    %80 = vsyncpa [#allocation6], 1
    %81 = vsyncpa [#allocation4], 1

</llo_original>
